<compile_context>
chip_gen: v7x
topology: tpu7x:2x2x1
jax: 0.10.0
libtpu: 0.0.40
codegen_flags: <defaults>
</compile_context>

<pallas_src>
import jax
import jax.numpy as jnp
from jax.experimental import pallas as pl
from jax.experimental.pallas import tpu as pltpu


# Contract on in_features: lhs (TB, K) x rhs (E, K) -> (TB, E).
_DN_IN_FEATURES = (((1,), (1,)), ((), ()))


def time_embedding_kernel(t_ref, w1_ref, b1_ref, w2_ref, b2_ref, out_ref):
    # First linear: (TB, T) x (E, T)^T -> (TB, E), f32 accumulation on MXU.
    h = jax.lax.dot_general(
        t_ref[...], w1_ref[...], _DN_IN_FEATURES,
        preferred_element_type=jnp.float32)
    h = h + b1_ref[...]
    # SiLU in f32 (EUP sigmoid + VPU mul).
    h = h * jax.nn.sigmoid(h)
    # Second linear: (TB, E) x (E, E)^T -> (TB, E).
    o = jax.lax.dot_general(
        h, w2_ref[...], _DN_IN_FEATURES,
        preferred_element_type=jnp.float32)
    o = o + b2_ref[...]
    out_ref[...] = o.astype(out_ref.dtype)


def time_embedding(t, w1, b1, w2, b2, *, block_b=None):
    """Fused Linear -> SiLU -> Linear.

    t : (B, time_dim)
    w1: (embed_dim, time_dim)  (PyTorch Linear layout: (out, in))
    b1: (embed_dim,)
    w2: (embed_dim, embed_dim)
    b2: (embed_dim,)
    """
    B, time_dim = t.shape
    embed_dim = w1.shape[0]

    # --- pick a batch tile -------------------------------------------------
    if block_b is None:
        block_b = 256
    block_b = min(block_b, B)
    # Keep tiles sublane-aligned and evenly dividing B; otherwise fall back to
    # a single full-batch block (always legal: block extent == array extent).
    if B % 8 != 0 or block_b % 8 != 0 or B % block_b != 0:
        block_b = B
    grid_b = B // block_b

    # Biases as (1, E) rows so they broadcast on the VPU inside the kernel.
    b1_row = b1.reshape(1, embed_dim)
    b2_row = b2.reshape(1, embed_dim)

    itemsize = jnp.dtype(t.dtype).itemsize

    # --- cost estimate (advisory, helps XLA scheduling) ---------------------
    flops = 2 * B * (time_dim * embed_dim + embed_dim * embed_dim)
    transcendentals = B * embed_dim  # sigmoid
    bytes_accessed = itemsize * (
        B * time_dim + B * embed_dim            # t in, out
        + embed_dim * time_dim + embed_dim      # w1, b1
        + embed_dim * embed_dim + embed_dim)    # w2, b2
    cost = pl.CostEstimate(
        flops=flops, transcendentals=transcendentals,
        bytes_accessed=bytes_accessed)

    # --- conservative VMEM budget (double-buffer everything, 2x headroom) ---
    vmem_bytes = 2 * itemsize * (
        block_b * time_dim + block_b * embed_dim
        + embed_dim * time_dim + embed_dim * embed_dim + 2 * embed_dim)
    vmem_limit = min(max(2 * vmem_bytes, 16 * 1024 * 1024), 64 * 1024 * 1024)
    # TODO(synk): for very large embed_dim, additionally tile the second
    # matmul over its output (N) dimension so w2 need not be fully resident.

    return pl.pallas_call(
        time_embedding_kernel,
        out_shape=jax.ShapeDtypeStruct((B, embed_dim), t.dtype),
        grid_spec=pltpu.PrefetchScalarGridSpec(
            num_scalar_prefetch=0,
            grid=(grid_b,),
            in_specs=[
                # Activation tiles stream with the grid.
                pl.BlockSpec((block_b, time_dim), lambda i: (i, 0)),
                # Weights / biases: constant block index -> VMEM-resident,
                # fetched once across the whole grid.
                pl.BlockSpec((embed_dim, time_dim), lambda i: (0, 0)),
                pl.BlockSpec((1, embed_dim), lambda i: (0, 0)),
                pl.BlockSpec((embed_dim, embed_dim), lambda i: (0, 0)),
                pl.BlockSpec((1, embed_dim), lambda i: (0, 0)),
            ],
            out_specs=pl.BlockSpec((block_b, embed_dim), lambda i: (i, 0)),
        ),
        compiler_params=pltpu.CompilerParams(
            dimension_semantics=("parallel",),
            vmem_limit_bytes=vmem_limit),
        cost_estimate=cost,
    )(t, w1, b1_row, w2, b2_row)


if __name__ == "__main__":
    # Small but representative shapes: lane-dense embed_dim (multiple of 128)
    # and a batch that exercises the tiled / pipelined path (grid of 2).
    B = 16
    time_dim = 32
    embed_dim = 128

    key = jax.random.PRNGKey(0)
    k_t, k_w1, k_b1, k_w2, k_b2 = jax.random.split(key, 5)

    # PyTorch Linear parameter layout: (out_features, in_features).
    t = jax.random.normal(k_t, (B, time_dim), dtype=jnp.float32)
    w1 = jax.random.normal(k_w1, (embed_dim, time_dim), dtype=jnp.float32) * 0.1
    b1 = jax.random.normal(k_b1, (embed_dim,), dtype=jnp.float32) * 0.1
    w2 = jax.random.normal(k_w2, (embed_dim, embed_dim), dtype=jnp.float32) * 0.1
    b2 = jax.random.normal(k_b2, (embed_dim,), dtype=jnp.float32) * 0.1

    out = time_embedding(t, w1, b1, w2, b2, block_b=8)
    out = jax.block_until_ready(out)

    # Pure-JAX reference of the exact forward semantics.
    h_ref = t @ w1.T + b1
    h_ref = h_ref * jax.nn.sigmoid(h_ref)
    ref = h_ref @ w2.T + b2
    assert out.shape == (B, embed_dim)
    assert jnp.allclose(out, ref, atol=1e-4, rtol=1e-4), (
        float(jnp.max(jnp.abs(out - ref))))

    print("KERNEL_OK")
</pallas_src>

<mosaic_0001>
module attributes {stable_mosaic.version = 11 : i64} {
  func.func @time_embedding_kernel(%arg0: i32, %arg1: memref<8x32xf32, #tpu.memory_space<vmem>>, %arg2: memref<128x32xf32, #tpu.memory_space<vmem>>, %arg3: memref<1x128xf32, #tpu.memory_space<vmem>>, %arg4: memref<128x128xf32, #tpu.memory_space<vmem>>, %arg5: memref<1x128xf32, #tpu.memory_space<vmem>>, %arg6: memref<8x128xf32, #tpu.memory_space<vmem>>) attributes {dimension_semantics = [#tpu.dimension_semantics<parallel>], iteration_bounds = array<i64: 2>, scalar_prefetch = 0 : i64, scratch_operands = 0 : i64, tpu.core_type = #tpu.core_type<tc>, window_params = [{transform_indices = @transform_0, window_bounds = array<i64: 8, 32>}, {pipeline_mode = #tpu.pipeline_mode<synchronous>, transform_indices = @transform_1, window_bounds = array<i64: 128, 32>}, {pipeline_mode = #tpu.pipeline_mode<synchronous>, transform_indices = @transform_2, window_bounds = array<i64: 1, 128>}, {pipeline_mode = #tpu.pipeline_mode<synchronous>, transform_indices = @transform_3, window_bounds = array<i64: 128, 128>}, {pipeline_mode = #tpu.pipeline_mode<synchronous>, transform_indices = @transform_4, window_bounds = array<i64: 1, 128>}, {transform_indices = @transform_5, window_bounds = array<i64: 8, 128>}]} {
    %c0 = arith.constant 0 : index
    %c0_0 = arith.constant 0 : index
    %0 = vector.load %arg1[%c0, %c0_0] : memref<8x32xf32, #tpu.memory_space<vmem>>, vector<8x32xf32>
    %c0_1 = arith.constant 0 : index
    %c0_2 = arith.constant 0 : index
    %1 = vector.load %arg2[%c0_1, %c0_2] : memref<128x32xf32, #tpu.memory_space<vmem>>, vector<128x32xf32>
    %cst = arith.constant dense<0.000000e+00> : vector<8x128xf32>
    %2 = tpu.matmul %0, %1, %cst {dimension_numbers = #tpu.dot_dimension_numbers<[1], [1], [0], [0], [0, 0, 1, 0], [], []>} : vector<8x32xf32>, vector<128x32xf32>, vector<8x128xf32> -> vector<8x128xf32>
    %c0_3 = arith.constant 0 : index
    %c0_4 = arith.constant 0 : index
    %3 = vector.load %arg3[%c0_3, %c0_4] : memref<1x128xf32, #tpu.memory_space<vmem>>, vector<1x128xf32>
    %4 = vector.broadcast %3 : vector<1x128xf32> to vector<8x128xf32>
    %5 = arith.addf %2, %4 : vector<8x128xf32>
    %6 = arith.negf %5 : vector<8x128xf32>
    %7 = math.exp %6 : vector<8x128xf32>
    %cst_5 = arith.constant 1.000000e+00 : f32
    %8 = vector.broadcast %cst_5 : f32 to vector<8x128xf32>
    %9 = arith.addf %8, %7 : vector<8x128xf32>
    %10 = arith.divf %8, %9 : vector<8x128xf32>
    %11 = arith.mulf %5, %10 : vector<8x128xf32>
    %c0_6 = arith.constant 0 : index
    %c0_7 = arith.constant 0 : index
    %12 = vector.load %arg4[%c0_6, %c0_7] : memref<128x128xf32, #tpu.memory_space<vmem>>, vector<128x128xf32>
    %cst_8 = arith.constant dense<0.000000e+00> : vector<8x128xf32>
    %13 = tpu.matmul %11, %12, %cst_8 {dimension_numbers = #tpu.dot_dimension_numbers<[1], [1], [0], [0], [0, 0, 1, 0], [], []>} : vector<8x128xf32>, vector<128x128xf32>, vector<8x128xf32> -> vector<8x128xf32>
    %c0_9 = arith.constant 0 : index
    %c0_10 = arith.constant 0 : index
    %14 = vector.load %arg5[%c0_9, %c0_10] : memref<1x128xf32, #tpu.memory_space<vmem>>, vector<1x128xf32>
    %15 = vector.broadcast %14 : vector<1x128xf32> to vector<8x128xf32>
    %16 = arith.addf %13, %15 : vector<8x128xf32>
    %c0_11 = arith.constant 0 : index
    %c0_12 = arith.constant 0 : index
    %17 = vector.load %arg6[%c0_11, %c0_12] : memref<8x128xf32, #tpu.memory_space<vmem>>, vector<8x128xf32>
    tpu.vector_store %arg6[%c0_11, %c0_12], %16 {strides = array<i32>} : memref<8x128xf32, #tpu.memory_space<vmem>>, vector<8x128xf32>,
    return
  }
  func.func @transform_0(%arg0: i32) -> (i32, i32) {
    %c0_i32 = arith.constant 0 : i32
    %c0_i32_0 = arith.constant 0 : i32
    return %arg0, %c0_i32 : i32, i32
  }
  func.func @transform_1(%arg0: i32) -> (i32, i32) {
    %c0_i32 = arith.constant 0 : i32
    %c0_i32_0 = arith.constant 0 : i32
    %c0_i32_1 = arith.constant 0 : i32
    return %c0_i32, %c0_i32_0 : i32, i32
  }
  func.func @transform_2(%arg0: i32) -> (i32, i32) {
    %c0_i32 = arith.constant 0 : i32
    %c0_i32_0 = arith.constant 0 : i32
    %c0_i32_1 = arith.constant 0 : i32
    return %c0_i32, %c0_i32_0 : i32, i32
  }
  func.func @transform_3(%arg0: i32) -> (i32, i32) {
    %c0_i32 = arith.constant 0 : i32
    %c0_i32_0 = arith.constant 0 : i32
    %c0_i32_1 = arith.constant 0 : i32
    return %c0_i32, %c0_i32_0 : i32, i32
  }
  func.func @transform_4(%arg0: i32) -> (i32, i32) {
    %c0_i32 = arith.constant 0 : i32
    %c0_i32_0 = arith.constant 0 : i32
    %c0_i32_1 = arith.constant 0 : i32
    return %c0_i32, %c0_i32_0 : i32, i32
  }
  func.func @transform_5(%arg0: i32) -> (i32, i32) {
    %c0_i32 = arith.constant 0 : i32
    %c0_i32_0 = arith.constant 0 : i32
    return %arg0, %c0_i32 : i32, i32
  }
}

</mosaic_0001>

<llo_original>
// kernel: tpu_custom_call.1
$region0: #{tpu_custom_call.1}
  #allocation0 [shape = 'u32[]', space=smem, size = 0x4, offset = 0x4, fixed_abs, tag = 'smem constant byte address 0x4 - core index']
  #allocation1 [shape = 'u32[144,128]{1,0:T(1,128)}', space=vmem, size = 0x12000, scoped, tag = 'internal scratch']
  %s0 = inlined_call_operand.vmem [shape: f32[16,32], index: 0, kind: input, shape index: {}]
  %s1 = inlined_call_operand.vmem [shape: f32[128,32], index: 1, kind: input, shape index: {}]
  %s2 = inlined_call_operand.vmem [shape: f32[1,128], index: 2, kind: input, shape index: {}]
  %s3 = inlined_call_operand.vmem [shape: f32[128,128], index: 3, kind: input, shape index: {}]
  %s4 = inlined_call_operand.vmem [shape: f32[1,128], index: 4, kind: input, shape index: {}]
  %s5 = inlined_call_operand.hbm [shape: f32[16,128], index: 5, kind: output, shape index: {}]
  %s6 = sld [smem:[#allocation0]]
  $region53: #{tpu_custom_call.1} parent=0
    _
  %s8 = ssub.s32 1, %s6
  %s9 = scalar_select 0, %s8, %s6
  $region1: #{tpu_custom_call.1} parent=0
    #allocation2 [shape = 'u8[8192]{0}', space=vmem, size = 0x2000, scoped, tag = 'output window, operand 0']
    #allocation3 [shape = 's32[2]{0}', space=sflag, size = 0x8, scoped, tag = 'scoped memory for tpu_custom_call.1']
    %10 = vsyncpa [#allocation3], 0
    %s11 = scalar_lea.sflag [#allocation3], 1
    %12 = vsyncpa %s11, 0
    loop: start=0, step=1, limit=4
    $region2: #{tpu_custom_call.1} parent=1 // loop_pre_header
      _
    $region3: #{tpu_custom_call.1} parent=1 // loop_header
      %s14 = sphi 0, %s18
      %p15 = scmp.ge.s32.totalorder %s14, 4
      %s24 = sphi 0, %s26
      %s27 = sphi 0, %s24
      %s28 = sphi 0, %s27
      %s44 = sphi 0, %s28
      %s48 = sphi 0, %s48
      %s50 = sphi 0, %s48
      %s51 = sphi 0, %s50
      %s65 = sphi 0, %s51
      %s69 = sphi 0, %s69
      %s71 = sphi 0, %s69
      %s72 = sphi 0, %s71
      %s86 = sphi 0, %s72
      %s90 = sphi 0, %s90
      %s92 = sphi 0, %s90
      %s93 = sphi 0, %s92
      %s107 = sphi 0, %s93
      %s111 = sphi 0, %s111
      %s113 = sphi 0, %s111
      %s114 = sphi 0, %s113
      %s128 = sphi 0, %s114
      %s134 = sphi 0, %s136
      %s137 = sphi 0, %s134
      %s138 = sphi 0, %s137
      %s154 = sphi 0, %s138
    $region4: #{tpu_custom_call.1} parent=1 // loop_header_branch
      %17 = sbr.rel (%p15) target = $region8
    $region5: #{tpu_custom_call.1} parent=1 // loop_body
      %s19 = ssub.s32 %s14, 1
      %s20 = ssub.s32 %s14, 2
      %s21 = sadd.s32 %s14, 1
      %s22 = ssub.s32 %s14, %s21
      %p23 = scmp.eq.s32.totalorder %s22, 0
      %s25 = sadd.s32 %s24, 1
      %s26 = scalar_select %p23, %s24, %s25
      %p29 = pneg %p23
      %p30 = scmp.eq.s32.totalorder %s14, 1
      %p31 = por %p29, %p30
      %p32 = scmp.ne.s32.totalorder %s24, %s27
      %p33 = scmp.eq.s32.totalorder %s14, 0
      %p34 = por %p32, %p33
      %p35 = scmp.ne.s32.totalorder %s24, %s27
      %p36 = scmp.eq.s32.totalorder %s19, 1
      %p37 = por %p35, %p36
      %p38 = scmp.ne.s32.totalorder %s27, %s28
      %p39 = scmp.eq.s32.totalorder %s19, 0
      %p40 = por %p38, %p39
      %p41 = scmp.ne.s32.totalorder %s27, %s28
      %p42 = scmp.eq.s32.totalorder %s20, 1
      %p43 = por %p41, %p42
      %p45 = scmp.ne.s32.totalorder %s28, %s44
      %p46 = scmp.eq.s32.totalorder %s20, 0
      %p47 = por %p45, %p46
      %s49 = sadd.s32 %s48, 1
      %p52 = scmp.eq.s32.totalorder %s14, 1
      %p53 = scmp.ne.s32.totalorder %s48, %s50
      %p54 = scmp.eq.s32.totalorder %s14, 0
      %p55 = por %p53, %p54
      %p56 = scmp.ne.s32.totalorder %s48, %s50
      %p57 = scmp.eq.s32.totalorder %s19, 1
      %p58 = por %p56, %p57
      %p59 = scmp.ne.s32.totalorder %s50, %s51
      %p60 = scmp.eq.s32.totalorder %s19, 0
      %p61 = por %p59, %p60
      %p62 = scmp.ne.s32.totalorder %s50, %s51
      %p63 = scmp.eq.s32.totalorder %s20, 1
      %p64 = por %p62, %p63
      %p66 = scmp.ne.s32.totalorder %s51, %s65
      %p67 = scmp.eq.s32.totalorder %s20, 0
      %p68 = por %p66, %p67
      %s70 = sadd.s32 %s69, 1
      %p73 = scmp.eq.s32.totalorder %s14, 1
      %p74 = scmp.ne.s32.totalorder %s69, %s71
      %p75 = scmp.eq.s32.totalorder %s14, 0
      %p76 = por %p74, %p75
      %p77 = scmp.ne.s32.totalorder %s69, %s71
      %p78 = scmp.eq.s32.totalorder %s19, 1
      %p79 = por %p77, %p78
      %p80 = scmp.ne.s32.totalorder %s71, %s72
      %p81 = scmp.eq.s32.totalorder %s19, 0
      %p82 = por %p80, %p81
      %p83 = scmp.ne.s32.totalorder %s71, %s72
      %p84 = scmp.eq.s32.totalorder %s20, 1
      %p85 = por %p83, %p84
      %p87 = scmp.ne.s32.totalorder %s72, %s86
      %p88 = scmp.eq.s32.totalorder %s20, 0
      %p89 = por %p87, %p88
      %s91 = sadd.s32 %s90, 1
      %p94 = scmp.eq.s32.totalorder %s14, 1
      %p95 = scmp.ne.s32.totalorder %s90, %s92
      %p96 = scmp.eq.s32.totalorder %s14, 0
      %p97 = por %p95, %p96
      %p98 = scmp.ne.s32.totalorder %s90, %s92
      %p99 = scmp.eq.s32.totalorder %s19, 1
      %p100 = por %p98, %p99
      %p101 = scmp.ne.s32.totalorder %s92, %s93
      %p102 = scmp.eq.s32.totalorder %s19, 0
      %p103 = por %p101, %p102
      %p104 = scmp.ne.s32.totalorder %s92, %s93
      %p105 = scmp.eq.s32.totalorder %s20, 1
      %p106 = por %p104, %p105
      %p108 = scmp.ne.s32.totalorder %s93, %s107
      %p109 = scmp.eq.s32.totalorder %s20, 0
      %p110 = por %p108, %p109
      %s112 = sadd.s32 %s111, 1
      %p115 = scmp.eq.s32.totalorder %s14, 1
      %p116 = scmp.ne.s32.totalorder %s111, %s113
      %p117 = scmp.eq.s32.totalorder %s14, 0
      %p118 = por %p116, %p117
      %p119 = scmp.ne.s32.totalorder %s111, %s113
      %p120 = scmp.eq.s32.totalorder %s19, 1
      %p121 = por %p119, %p120
      %p122 = scmp.ne.s32.totalorder %s113, %s114
      %p123 = scmp.eq.s32.totalorder %s19, 0
      %p124 = por %p122, %p123
      %p125 = scmp.ne.s32.totalorder %s113, %s114
      %p126 = scmp.eq.s32.totalorder %s20, 1
      %p127 = por %p125, %p126
      %p129 = scmp.ne.s32.totalorder %s114, %s128
      %p130 = scmp.eq.s32.totalorder %s20, 0
      %p131 = por %p129, %p130
      %s132 = ssub.s32 %s14, %s21
      %p133 = scmp.eq.s32.totalorder %s132, 0
      %s135 = sadd.s32 %s134, 1
      %s136 = scalar_select %p133, %s134, %s135
      %p139 = pneg %p133
      %p140 = scmp.eq.s32.totalorder %s14, 1
      %p141 = por %p139, %p140
      %p142 = scmp.ne.s32.totalorder %s134, %s137
      %p143 = scmp.eq.s32.totalorder %s14, 0
      %p144 = por %p142, %p143
      %p145 = scmp.ne.s32.totalorder %s134, %s137
      %p146 = scmp.eq.s32.totalorder %s19, 1
      %p147 = por %p145, %p146
      %p148 = scmp.ne.s32.totalorder %s137, %s138
      %p149 = scmp.eq.s32.totalorder %s19, 0
      %p150 = por %p148, %p149
      %p151 = scmp.ne.s32.totalorder %s137, %s138
      %p152 = scmp.eq.s32.totalorder %s20, 1
      %p153 = por %p151, %p152
      %p155 = scmp.ne.s32.totalorder %s138, %s154
      %p156 = scmp.eq.s32.totalorder %s20, 0
      %p157 = por %p155, %p156
      %p158 = scmp.le.s32.totalorder 1, %s14
      %p159 = scmp.lt.s32.totalorder %s14, 3
      %p160 = pnand %p158, %p159
      %p161 = pneg %p160
      // Predicated region
      $region9: #{tpu_custom_call.1} parent=5 // pred_check
        _
      $region10: #{tpu_custom_call.1} parent=5 // pred_check_branch
        %163 = sbr.rel (%p160) target = $region12
      $region11: #{tpu_custom_call.1} parent=5 // pred_region
        %s164 = ssub.s32 %s14, 1
        // Predicated region
        $region13: #{tpu_custom_call.1} parent=11 // pred_check
          %p165 = pneg %p61
        $region14: #{tpu_custom_call.1} parent=11 // pred_check_branch
          %167 = sbr.rel (%p165) target = $region16
        $region15: #{tpu_custom_call.1} parent=11 // pred_region
          _
        $region16: #{tpu_custom_call.1} parent=11 // pred_fallthru
          _
        // Predicated region
        $region17: #{tpu_custom_call.1} parent=11 // pred_check
          %p168 = pneg %p82
        $region18: #{tpu_custom_call.1} parent=11 // pred_check_branch
          %170 = sbr.rel (%p168) target = $region20
        $region19: #{tpu_custom_call.1} parent=11 // pred_region
          _
        $region20: #{tpu_custom_call.1} parent=11 // pred_fallthru
          _
        // Predicated region
        $region21: #{tpu_custom_call.1} parent=11 // pred_check
          %p171 = pneg %p103
        $region22: #{tpu_custom_call.1} parent=11 // pred_check_branch
          %173 = sbr.rel (%p171) target = $region24
        $region23: #{tpu_custom_call.1} parent=11 // pred_region
          _
        $region24: #{tpu_custom_call.1} parent=11 // pred_fallthru
          _
        // Predicated region
        $region25: #{tpu_custom_call.1} parent=11 // pred_check
          %p174 = pneg %p124
        $region26: #{tpu_custom_call.1} parent=11 // pred_check_branch
          %176 = sbr.rel (%p174) target = $region28
        $region27: #{tpu_custom_call.1} parent=11 // pred_region
          _
        $region28: #{tpu_custom_call.1} parent=11 // pred_fallthru
          _
      $region12: #{tpu_custom_call.1} parent=5 // pred_fallthru
        _
      %p177 = scmp.lt.s32.totalorder %s14, 2
      // Predicated region
      $region29: #{tpu_custom_call.1} parent=5 // pred_check
        %p178 = pneg %p177
      $region30: #{tpu_custom_call.1} parent=5 // pred_check_branch
        %180 = sbr.rel (%p178) target = $region32
      $region31: #{tpu_custom_call.1} parent=5 // pred_region
        // Predicated region
        $region33: #{tpu_custom_call.1} parent=31 // pred_check
          %p181 = pneg %p34
        $region34: #{tpu_custom_call.1} parent=31 // pred_check_branch
          %183 = sbr.rel (%p181) target = $region36
        $region35: #{tpu_custom_call.1} parent=31 // pred_region
          %p184 = scmp.lt.s32.totalorder %s14, 1
          %s185 = scalar_select %p184, %s14, 1
          %s186 = smul.addr %s185, 8
          %s187 = scalar_lea.vmem %s0, %s186
        $region36: #{tpu_custom_call.1} parent=31 // pred_fallthru
          _
      $region32: #{tpu_custom_call.1} parent=5 // pred_fallthru
        _
      %p188 = scmp.le.s32.totalorder 1, %s14
      %p189 = scmp.lt.s32.totalorder %s14, 3
      %p190 = pnand %p188, %p189
      %p191 = pneg %p190
      // Predicated region
      $region37: #{tpu_custom_call.1} parent=5 // pred_check
        _
      $region38: #{tpu_custom_call.1} parent=5 // pred_check_branch
        %193 = sbr.rel (%p190) target = $region40
      $region39: #{tpu_custom_call.1} parent=5 // pred_region
        %s194 = ssub.s32 %s14, 1
        %p195 = scmp.lt.s32.totalorder %s19, 1
        %s196 = scalar_select %p195, %s19, 1
        %s197 = smul.addr %s196, 8
        %s198 = scalar_lea.vmem %s0, %s197
        %p199 = pneg %p40
        %p200 = pneg %p37
        %p201 = pneg %p61
        %p202 = pneg %p58
        %p203 = pneg %p82
        %p204 = pneg %p79
        %p205 = pneg %p103
        %p206 = pneg %p100
        %p207 = pneg %p124
        %p208 = pneg %p121
        %p209 = pneg %p150
        %p210 = pneg %p147
        %s211 = sand.u32 %s137, 1
        %s212 = scalar_lea.sflag [#allocation3], %s211
        %s213 = sand.u32 %s137, 1
        %s214 = smul.addr %s213, 8
        %s215 = scalar_lea.vmem [#allocation2], %s214
        %p216 = scmp.lt.s32.totalorder %s19, 1
        %s217 = scalar_select %p216, %s19, 1
        %s218 = smul.addr %s217, 8
        %s219 = scalar_lea.vmem %s0, %s218
        %v220 = vld [vmem:[%s219] sm:$0xff]
        %v221 = vld [vmem:[%s1] sm:$0xff]
        %v222 = vld [vmem:[%s1 + $0x8] sm:$0xff]
        %v223 = vld [vmem:[%s1 + $0x10] sm:$0xff]
        %v224 = vld [vmem:[%s1 + $0x18] sm:$0xff]
        %v225 = vld [vmem:[%s1 + $0x20] sm:$0xff]
        %v226 = vld [vmem:[%s1 + $0x28] sm:$0xff]
        %v227 = vld [vmem:[%s1 + $0x30] sm:$0xff]
        %v228 = vld [vmem:[%s1 + $0x38] sm:$0xff]
        %v229 = vld [vmem:[%s1 + $0x40] sm:$0xff]
        %v230 = vld [vmem:[%s1 + $0x48] sm:$0xff]
        %v231 = vld [vmem:[%s1 + $0x50] sm:$0xff]
        %v232 = vld [vmem:[%s1 + $0x58] sm:$0xff]
        %v233 = vld [vmem:[%s1 + $0x60] sm:$0xff]
        %v234 = vld [vmem:[%s1 + $0x68] sm:$0xff]
        %v235 = vld [vmem:[%s1 + $0x70] sm:$0xff]
        %v236 = vld [vmem:[%s1 + $0x78] sm:$0xff]
        %v237 = vld [vmem:[%s2] sm:$0x1]
        %v239 = vlaneseq
        %v240 = vshrl.u32 %v239, 7
        %v241 = vsub.s32 0, %v240
        %v242 = vrot.slane %v237, %v241
        %vm244 = vcmask 261120
        %v246 = vsel %vm244, %v220, 0
        %v249 = vsel %vm244, %v221, 0
        %v252 = vsel %vm244, %v222, 0
        %v255 = vsel %vm244, %v223, 0
        %v258 = vsel %vm244, %v224, 0
        %v261 = vsel %vm244, %v225, 0
        %v264 = vsel %vm244, %v226, 0
        %v267 = vsel %vm244, %v227, 0
        %v270 = vsel %vm244, %v228, 0
        %v273 = vsel %vm244, %v229, 0
        %v276 = vsel %vm244, %v230, 0
        %v279 = vsel %vm244, %v231, 0
        %v282 = vsel %vm244, %v232, 0
        %v285 = vsel %vm244, %v233, 0
        %v288 = vsel %vm244, %v234, 0
        %v291 = vsel %vm244, %v235, 0
        %v294 = vsel %vm244, %v236, 0
        %296 = vmatprep.subr.mxu0 0.0
        %297 = vmatpush1.xpose.msra.mxu0 %v249
        %298 = vmatprep.subr.mxu0 0.0
        %299 = vmatpush1.xpose.msra.mxu0 %v252
        %300 = vmatprep.subr.mxu0 0.0
        %301 = vmatpush1.xpose.msra.mxu0 %v255
        %302 = vmatprep.subr.mxu0 0.0
        %303 = vmatpush1.xpose.msra.mxu0 %v258
        %304 = vmatprep.subr.mxu0 0.0
        %305 = vmatpush1.xpose.msra.mxu0 %v261
        %306 = vmatprep.subr.mxu0 0.0
        %307 = vmatpush1.xpose.msra.mxu0 %v264
        %308 = vmatprep.subr.mxu0 0.0
        %309 = vmatpush1.xpose.msra.mxu0 %v267
        %310 = vmatprep.subr.mxu0 0.0
        %311 = vmatpush1.xpose.msra.mxu0 %v270
        %312 = vmatprep.subr.mxu0 0.0
        %313 = vmatpush1.xpose.msra.mxu0 %v273
        %314 = vmatprep.subr.mxu0 0.0
        %315 = vmatpush1.xpose.msra.mxu0 %v276
        %316 = vmatprep.subr.mxu0 0.0
        %317 = vmatpush1.xpose.msra.mxu0 %v279
        %318 = vmatprep.subr.mxu0 0.0
        %319 = vmatpush1.xpose.msra.mxu0 %v282
        %320 = vmatprep.subr.mxu0 0.0
        %321 = vmatpush1.xpose.msra.mxu0 %v285
        %322 = vmatprep.subr.mxu0 0.0
        %323 = vmatpush1.xpose.msra.mxu0 %v288
        %324 = vmatprep.subr.mxu0 0.0
        %325 = vmatpush1.xpose.msra.mxu0 %v291
        %326 = vmatprep.subr.mxu0 0.0
        %327 = vmatpush1.xpose.msra.mxu0 %v294
        %328 = vmatprep.subr.mxu0 0.0
        %329 = vmatpush1.xpose.msra.mxu0 0.0
        %330 = vmatprep.subr.mxu0 0.0
        %331 = vmatpush1.xpose.msra.mxu0 0.0
        %332 = vmatprep.subr.mxu0 0.0
        %333 = vmatpush1.xpose.msra.mxu0 0.0
        %334 = vmatprep.subr.mxu0 0.0
        %335 = vmatpush1.xpose.msra.mxu0 0.0
        %336 = vmatprep.subr.mxu0 0.0
        %337 = vmatpush1.xpose.msra.mxu0 0.0
        %338 = vmatprep.subr.mxu0 0.0
        %339 = vmatpush1.xpose.msra.mxu0 0.0
        %340 = vmatprep.subr.mxu0 0.0
        %341 = vmatpush1.xpose.msra.mxu0 0.0
        %342 = vmatprep.subr.mxu0 0.0
        %343 = vmatpush1.xpose.msra.mxu0 0.0
        %344 = vmatprep.subr.mxu0 0.0
        %345 = vmatpush1.xpose.msra.mxu0 0.0
        %346 = vmatprep.subr.mxu0 0.0
        %347 = vmatpush1.xpose.msra.mxu0 0.0
        %348 = vmatprep.subr.mxu0 0.0
        %349 = vmatpush1.xpose.msra.mxu0 0.0
        %350 = vmatprep.subr.mxu0 0.0
        %351 = vmatpush1.xpose.msra.mxu0 0.0
        %352 = vmatprep.subr.mxu0 0.0
        %353 = vmatpush1.xpose.msra.mxu0 0.0
        %354 = vmatprep.subr.mxu0 0.0
        %355 = vmatpush1.xpose.msra.mxu0 0.0
        %356 = vmatprep.subr.mxu0 0.0
        %357 = vmatpush1.xpose.msra.mxu0 0.0
        %358 = vmatprep.subr.mxu0 0.0
        %359 = vmatpush1.xpose.msra.mxu0 0.0
        %360 = vmatprep.mubr.f32.mxu0 0.0
        %361 = vmatmul.mubr.f32.gmra.mrb[0].mxu0 %v246
        %v362 = vpop.f32.mrb[0].mxu0
        %v363 = vadd.f32 %v242, %v362
        %v364 = vpop.f32.mrb[0].mxu0
        %365 = vdwg.mxu0
        %v366 = vxor.u32 %v363, 2147483648
        %v367 = vmul.f32 %v366, 1.442695
        %v368 = vpow.pop %v367
        %v369 = vadd.f32 %v368, 1.0
        %v370 = vrcp.pop %v369
        %v371 = vmul.f32 1.0, %v370
        %v372 = vmul.f32 %v363, %v371
        %v373 = vld [vmem:[%s3] sm:$0xff]
        %v374 = vld [vmem:[%s3 + $0x8] sm:$0xff]
        %v375 = vld [vmem:[%s3 + $0x10] sm:$0xff]
        %v376 = vld [vmem:[%s3 + $0x18] sm:$0xff]
        %v377 = vld [vmem:[%s3 + $0x20] sm:$0xff]
        %v378 = vld [vmem:[%s3 + $0x28] sm:$0xff]
        %v379 = vld [vmem:[%s3 + $0x30] sm:$0xff]
        %v380 = vld [vmem:[%s3 + $0x38] sm:$0xff]
        %v381 = vld [vmem:[%s3 + $0x40] sm:$0xff]
        %v382 = vld [vmem:[%s3 + $0x48] sm:$0xff]
        %v383 = vld [vmem:[%s3 + $0x50] sm:$0xff]
        %v384 = vld [vmem:[%s3 + $0x58] sm:$0xff]
        %v385 = vld [vmem:[%s3 + $0x60] sm:$0xff]
        %v386 = vld [vmem:[%s3 + $0x68] sm:$0xff]
        %v387 = vld [vmem:[%s3 + $0x70] sm:$0xff]
        %v388 = vld [vmem:[%s3 + $0x78] sm:$0xff]
        %v389 = vld [vmem:[%s4] sm:$0x1]
        %v391 = vlaneseq
        %v392 = vshrl.u32 %v391, 7
        %v393 = vsub.s32 0, %v392
        %v394 = vrot.slane %v389, %v393
        %396 = vmatprep.subr.mxu0 0.0
        %397 = vmatpush1.xpose.msra.mxu0 %v373
        %398 = vmatprep.subr.mxu0 0.0
        %399 = vmatpush1.xpose.msra.mxu0 %v374
        %400 = vmatprep.subr.mxu0 0.0
        %401 = vmatpush1.xpose.msra.mxu0 %v375
        %402 = vmatprep.subr.mxu0 0.0
        %403 = vmatpush1.xpose.msra.mxu0 %v376
        %404 = vmatprep.subr.mxu0 0.0
        %405 = vmatpush1.xpose.msra.mxu0 %v377
        %406 = vmatprep.subr.mxu0 0.0
        %407 = vmatpush1.xpose.msra.mxu0 %v378
        %408 = vmatprep.subr.mxu0 0.0
        %409 = vmatpush1.xpose.msra.mxu0 %v379
        %410 = vmatprep.subr.mxu0 0.0
        %411 = vmatpush1.xpose.msra.mxu0 %v380
        %412 = vmatprep.subr.mxu0 0.0
        %413 = vmatpush1.xpose.msra.mxu0 %v381
        %414 = vmatprep.subr.mxu0 0.0
        %415 = vmatpush1.xpose.msra.mxu0 %v382
        %416 = vmatprep.subr.mxu0 0.0
        %417 = vmatpush1.xpose.msra.mxu0 %v383
        %418 = vmatprep.subr.mxu0 0.0
        %419 = vmatpush1.xpose.msra.mxu0 %v384
        %420 = vmatprep.subr.mxu0 0.0
        %421 = vmatpush1.xpose.msra.mxu0 %v385
        %422 = vmatprep.subr.mxu0 0.0
        %423 = vmatpush1.xpose.msra.mxu0 %v386
        %424 = vmatprep.subr.mxu0 0.0
        %425 = vmatpush1.xpose.msra.mxu0 %v387
        %426 = vmatprep.subr.mxu0 0.0
        %427 = vmatpush1.xpose.msra.mxu0 %v388
        %428 = vmatprep.subr.mxu0 0.0
        %429 = vmatpush1.xpose.msra.mxu0 0.0
        %430 = vmatprep.subr.mxu0 0.0
        %431 = vmatpush1.xpose.msra.mxu0 0.0
        %432 = vmatprep.subr.mxu0 0.0
        %433 = vmatpush1.xpose.msra.mxu0 0.0
        %434 = vmatprep.subr.mxu0 0.0
        %435 = vmatpush1.xpose.msra.mxu0 0.0
        %436 = vmatprep.subr.mxu0 0.0
        %437 = vmatpush1.xpose.msra.mxu0 0.0
        %438 = vmatprep.subr.mxu0 0.0
        %439 = vmatpush1.xpose.msra.mxu0 0.0
        %440 = vmatprep.subr.mxu0 0.0
        %441 = vmatpush1.xpose.msra.mxu0 0.0
        %442 = vmatprep.subr.mxu0 0.0
        %443 = vmatpush1.xpose.msra.mxu0 0.0
        %444 = vmatprep.subr.mxu0 0.0
        %445 = vmatpush1.xpose.msra.mxu0 0.0
        %446 = vmatprep.subr.mxu0 0.0
        %447 = vmatpush1.xpose.msra.mxu0 0.0
        %448 = vmatprep.subr.mxu0 0.0
        %449 = vmatpush1.xpose.msra.mxu0 0.0
        %450 = vmatprep.subr.mxu0 0.0
        %451 = vmatpush1.xpose.msra.mxu0 0.0
        %452 = vmatprep.subr.mxu0 0.0
        %453 = vmatpush1.xpose.msra.mxu0 0.0
        %454 = vmatprep.subr.mxu0 0.0
        %455 = vmatpush1.xpose.msra.mxu0 0.0
        %456 = vmatprep.subr.mxu0 0.0
        %457 = vmatpush1.xpose.msra.mxu0 0.0
        %458 = vmatprep.subr.mxu0 0.0
        %459 = vmatpush1.xpose.msra.mxu0 0.0
        %460 = vmatprep.mubr.f32.mxu0 0.0
        %461 = vmatmul.mubr.f32.gmra.mrb[0].mxu0 %v372
        %v462 = vpop.f32.mrb[0].mxu0
        %v463 = vadd.f32 %v394, %v462
        %v464 = vpop.f32.mrb[0].mxu0
        %465 = vdwg.mxu0
        %466 = vst [vmem:[%s215] sm:$0xff] %v463
        %s467 = sand.u32 %s137, 1
        %s468 = scalar_lea.sflag [#allocation3], %s467
        %s469 = sand.u32 %s137, 1
        %s470 = smul.addr %s469, 8
        %s471 = scalar_lea.vmem [#allocation2], %s470
        // Predicated region
        $region41: #{tpu_custom_call.1} parent=39 // pred_check
          %p472 = pneg %p147
        $region42: #{tpu_custom_call.1} parent=39 // pred_check_branch
          %474 = sbr.rel (%p472) target = $region44
        $region43: #{tpu_custom_call.1} parent=39 // pred_region
          %s476 = ssub.s32 128, 128
          %477 = vsyncadd %s468, %s476
          %s478 = smul.addr %s19, 128
          %s479 = scalar_lea.hbm %s5, %s478
          %s481 = sshll.u32 %s471, 4
          %s482 = int_to_ptr.vmem [resolvable:$true] %s481
          %484 = dma.vmem_to_hbm [thread:$0]  %s482, 128, %s479, %s468
        $region44: #{tpu_custom_call.1} parent=39 // pred_fallthru
          _
      $region40: #{tpu_custom_call.1} parent=5 // pred_fallthru
        _
      %p485 = scmp.le.s32.totalorder 2, %s14
      // Predicated region
      $region45: #{tpu_custom_call.1} parent=5 // pred_check
        %p486 = pneg %p485
      $region46: #{tpu_custom_call.1} parent=5 // pred_check_branch
        %488 = sbr.rel (%p486) target = $region48
      $region47: #{tpu_custom_call.1} parent=5 // pred_region
        %s489 = ssub.s32 %s14, 2
        // Predicated region
        $region49: #{tpu_custom_call.1} parent=47 // pred_check
          %p490 = pneg %p153
        $region50: #{tpu_custom_call.1} parent=47 // pred_check_branch
          %492 = sbr.rel (%p490) target = $region52
        $region51: #{tpu_custom_call.1} parent=47 // pred_region
          %s493 = sand.u32 %s138, 1
          %s494 = scalar_lea.sflag [#allocation3], %s493
          %s495 = sand.u32 %s138, 1
          %s496 = smul.addr %s495, 8
          %s497 = scalar_lea.vmem [#allocation2], %s496
          %498 = dma.done %s494, 128
        $region52: #{tpu_custom_call.1} parent=47 // pred_fallthru
          _
      $region48: #{tpu_custom_call.1} parent=5 // pred_fallthru
        _
    $region6: #{tpu_custom_call.1} parent=1 // loop_footer
      %s18 = sadd.s32 1, %s14
    $region7: #{tpu_custom_call.1} parent=1 // loop_footer_branch
      %13 = sbr.rel target = $region3
    $region8: #{tpu_custom_call.1} parent=1 // loop_exit
      _
    %499 = vsyncpa [#allocation3], 1
    %s500 = scalar_lea.sflag [#allocation3], 1
    %501 = vsyncpa %s500, 1

</llo_original>
